<compile_context>
chip_gen: v6e
topology: v6e:2x2x1
jax: 0.10.0
libtpu: 0.0.40
codegen_flags: <defaults>
</compile_context>

<pallas_src>
import functools
from dataclasses import dataclass
from typing import Callable, Optional

import jax
import jax.numpy as jnp
from jax import lax
from jax.experimental import pallas as pl
from jax.experimental.pallas import tpu as pltpu


def _default_loss_target(obj, cls):
    return obj * cls


@dataclass
class Config:
    n_classes: int
    objective_class_id: Optional[int]
    # loss_target(objectness, class_conf) -> combined confidence.
    # NOTE: must be ELEMENTWISE -- the packed kernel evaluates it on garbage
    # non-anchor lanes before jnp.where overwrites them with -inf.
    loss_target: Callable = _default_loss_target


# ---------------------------------------------------------------------------
# Kernels
# ---------------------------------------------------------------------------

def _kernel_rows(x_ref, o_ref, acc_ref, *, n_classes, objective_class_id,
                 loss_target, num_preds, tile_n, tiles_per_split):
    """Fallback path: block = (1, tile_n, C); channel axis on lanes.

    This is the production-hot path for real YOLO heads (C = 85)."""
    s = pl.program_id(1)
    t = pl.program_id(2)

    @pl.when(t == 0)
    def _():
        acc_ref[...] = jnp.full(acc_ref.shape, -jnp.inf, dtype=acc_ref.dtype)

    x = x_ref[0]                                   # (tile_n, C)
    if x.dtype != jnp.float32:
        x = x.astype(jnp.float32)                  # upcast once, in-VMEM
    objectness = x[:, 4:5]                         # (tile_n, 1)
    class_confs = x[:, 5:5 + n_classes]            # (tile_n, n_classes)

    if objective_class_id is not None:
        m = jnp.max(class_confs, axis=-1, keepdims=True)
        e = jnp.exp(class_confs - m)               # one exp; reused for numerator
        denom = jnp.sum(e, axis=-1, keepdims=True)
        numer = e[:, objective_class_id:objective_class_id + 1]
        cls_score = numer * pl.reciprocal(denom, approx=True)
    else:
        cls_score = jnp.max(class_confs, axis=-1, keepdims=True)

    conf = loss_target(objectness, cls_score)      # (tile_n, 1)

    # Mask padded tail rows (grid uses pl.cdiv; last block can run past num_preds).
    row = lax.broadcasted_iota(jnp.int32, conf.shape, 0)
    start = (s * tiles_per_split + t) * tile_n
    conf = jnp.where(start + row < num_preds, conf, -jnp.inf)

    # Fold the tile into (8, 1) with a sublane-aligned reshape + cross-vreg max
    # (pure VPU) and keep the running max in a tiny scratch.  No per-step
    # cross-lane/sublane reduce and no revisited output store.
    if tile_n % 8 == 0:
        part = jnp.max(conf.reshape(tile_n // 8, 8, 1), axis=0)     # (8, 1)
    else:
        part = jnp.max(conf, axis=0, keepdims=True)                 # (1, 1)
    acc_ref[:part.shape[0], :1] = jnp.maximum(acc_ref[:part.shape[0], :1], part)

    @pl.when(t == pl.num_programs(2) - 1)
    def _():
        o_ref[...] = acc_ref[...].reshape(o_ref.shape)


def _kernel_packed(x_ref, o_ref, acc_ref, *, n_classes, objective_class_id,
                   loss_target, chans, num_rows, tile_rows, tiles_per_split):
    """Lane-dense path: block = (1, tile_rows, 128); each 128-lane row holds
    128 // chans predictions back to back (predictions never straddle a row)."""
    s = pl.program_id(1)
    t = pl.program_id(2)

    @pl.when(t == 0)
    def _():
        acc_ref[...] = jnp.full(acc_ref.shape, -jnp.inf, dtype=acc_ref.dtype)

    x = x_ref[0]                                   # (tile_rows, 128)
    if x.dtype != jnp.float32:
        x = x.astype(jnp.float32)
    lanes = x.shape[-1]
    neg_inf = jnp.float32(-jnp.inf)

    lane = lax.broadcasted_iota(jnp.int32, x.shape, 1)
    off = lane % chans                             # lane offset within prediction
    is_obj = off == 4
    is_cls = off >= 5                              # chans == 5 + n_classes

    def shl(v, sft):                               # result[r, l] = v[r, (l+sft)%128]
        return pltpu.roll(v, shift=(-sft) % lanes, axis=1)

    def shr(v, sft):                               # result[r, l] = v[r, (l-sft)%128]
        return pltpu.roll(v, shift=sft % lanes, axis=1)

    # Doubling-tree depth: window 2^k >= n_classes + 1, and 2^k <= chans, so the
    # suffix / backward windows never reach a neighbouring prediction's classes.
    k = n_classes.bit_length()

    # 1) per-prediction class max, landed on the objectness lane (suffix max tree).
    vcls = jnp.where(is_cls, x, neg_inf)
    m = vcls
    sft = 1
    for _ in range(k):
        m = jnp.maximum(m, shl(m, sft))
        sft *= 2
    # m[obj lane] == max over that prediction's class lanes.

    if objective_class_id is not None:
        # 2) broadcast the max back onto the class lanes (backward hold tree).
        mb = jnp.where(is_obj, m, neg_inf)
        sft = 1
        for _ in range(k):
            mb = jnp.maximum(mb, shr(mb, sft))
            sft *= 2
        # 3) exactly one exp over the tile; zero everywhere but class lanes.
        ez = jnp.where(is_cls, jnp.exp(x - mb), 0.0)
        # 4) segmented denominator, landed on the objectness lane (suffix add tree).
        den = ez
        sft = 1
        for _ in range(k):
            den = den + shl(den, sft)
            sft *= 2
        # 5) numerator = already-exp'd objective-class lane, one extra roll.
        numer = shl(ez, 1 + objective_class_id)
        cls_score = numer * pl.reciprocal(den, approx=True)
    else:
        cls_score = m

    # x is the objectness value on anchor lanes; other lanes are masked below.
    conf = loss_target(x, cls_score)

    row = lax.broadcasted_iota(jnp.int32, x.shape, 0)
    start = (s * tiles_per_split + t) * tile_rows
    valid = is_obj & (start + row < num_rows)
    conf = jnp.where(valid, conf, -jnp.inf)

    # Fold to a single (8, 128) vreg (sublane-aligned reshape + cross-vreg max,
    # pure VPU) and keep the running max in the tiny scratch.
    part = jnp.max(conf.reshape(tile_rows // 8, 8, lanes), axis=0)
    acc_ref[...] = jnp.maximum(acc_ref[...], part)

    @pl.when(t == pl.num_programs(2) - 1)
    def _():
        o_ref[...] = acc_ref[...].reshape(o_ref.shape)


# ---------------------------------------------------------------------------
# Wrapper
# ---------------------------------------------------------------------------

def _vmem_capacity_bytes() -> int:
    try:
        return int(pltpu.get_tpu_info().vmem_capacity_bytes)
    except Exception:
        return 64 << 20        # conservative default (v7x per-TC VMEM)


def _pick_tile_rows(rows_total: int, bytes_per_row: int, vmem_cap: int,
                    max_rows: Optional[int], q: int) -> int:
    """Rows per block: as big as a ~<=12 MiB double-buffered input allows."""
    per_buf = max(1 << 20, min(12 << 20, vmem_cap // 6))
    cap = max(q, (per_buf // max(1, bytes_per_row)) // q * q)
    if max_rows is not None:
        cap = min(cap, max(q, (max_rows // q) * q))
    if rows_total <= q:
        return rows_total                          # full-dim block (always legal)
    return min(cap, (rows_total // q) * q)


def _pick_splits(total_tiles: int, num_splits: int) -> int:
    """Largest divisor of total_tiles <= num_splits (so splits*tps == total_tiles)."""
    num_splits = max(1, min(num_splits, total_tiles))
    for s in range(num_splits, 0, -1):
        if total_tiles % s == 0:
            return s
    return 1


def max_prob_extractor(output: jax.Array, config: Config, *,
                       max_block_rows: Optional[int] = None,
                       pack_lanes: bool = True,
                       num_splits: int = 1) -> jax.Array:
    """JAX/Pallas equivalent of MaxProbExtractor.forward.

    output: [batch, num_preds, 5 + n_classes]  (float32 or bfloat16)
    returns: [batch] float32

    num_splits: split the prediction axis across this many grid slots.  Leave at
      1 on single-TensorCore chips (v5e/v6e); pass 2 on v7x when batch == 1 so
      both TensorCores get work.
    """
    B, N, C = output.shape
    assert C == 5 + config.n_classes
    if config.objective_class_id is not None:
        assert 0 <= config.objective_class_id < config.n_classes

    vmem_cap = _vmem_capacity_bytes()
    esize = jnp.dtype(output.dtype).itemsize
    subq = {4: 8, 2: 16, 1: 32}.get(esize, 8)      # sublane quantum per dtype

    g = 128 // C if 128 % C == 0 else 0
    use_packed = pack_lanes and g > 0 and N % g == 0 and (N // g) >= subq

    common = dict(n_classes=config.n_classes,
                  objective_class_id=config.objective_class_id,
                  loss_target=config.loss_target)

    if use_packed:
        rows = N // g
        x = output.reshape(B, rows, 128)           # contiguous wrapper-side reshape
        bytes_per_row = 128 * esize
        tile_rows = _pick_tile_rows(rows, bytes_per_row, vmem_cap, max_block_rows, subq)
        total_tiles = pl.cdiv(rows, tile_rows)
        splits = _pick_splits(total_tiles, num_splits)
        tps = total_tiles // splits
        kernel = functools.partial(_kernel_packed, chans=C, num_rows=rows,
                                   tile_rows=tile_rows, tiles_per_split=tps, **common)
        in_spec = pl.BlockSpec((1, tile_rows, 128),
                               lambda b, s, t: (b, s * tps + t, 0))
        block_bytes = tile_rows * bytes_per_row
    else:
        x = output
        lane_bytes = ((C + 127) // 128) * 128 * esize   # lane-padded VMEM footprint
        tile_n = _pick_tile_rows(N, lane_bytes, vmem_cap, max_block_rows, subq)
        total_tiles = pl.cdiv(N, tile_n)
        splits = _pick_splits(total_tiles, num_splits)
        tps = total_tiles // splits
        kernel = functools.partial(_kernel_rows, num_preds=N, tile_n=tile_n,
                                   tiles_per_split=tps, **common)
        in_spec = pl.BlockSpec((1, tile_n, C),
                               lambda b, s, t: (b, s * tps + t, 0))
        block_bytes = tile_n * lane_bytes

    vmem_limit = int(min(max(2 * block_bytes + (4 << 20), 32 << 20),
                         (vmem_cap * 3) // 4))

    out = pl.pallas_call(
        kernel,
        out_shape=jax.ShapeDtypeStruct((B, splits, 8, 128), jnp.float32),
        grid=(B, splits, tps),
        in_specs=[in_spec],
        out_specs=pl.BlockSpec((1, 1, 8, 128), lambda b, s, t: (b, s, 0, 0)),
        scratch_shapes=[pltpu.VMEM((8, 128), jnp.float32)],
        compiler_params=pltpu.CompilerParams(
            # TODO(synk): switch the split axis to pltpu.CORE_PARALLEL once v7x
            # core-count detection is wired up; plain "parallel" is harmless on
            # single-TC chips and the default num_splits=1 avoids the overhead.
            dimension_semantics=("parallel", "parallel", "arbitrary"),
            vmem_limit_bytes=vmem_limit),
    )(x)

    # Partial per-(batch, split) running-max vregs combine associatively.
    return jnp.max(out, axis=(1, 2, 3))


def max_prob_extractor_ref(output: jax.Array, config: Config) -> jax.Array:
    """Pure-JAX reference (mirrors the PyTorch forward exactly)."""
    class_confs = output[:, :, 5:5 + config.n_classes]
    objectness = output[:, :, 4]
    if config.objective_class_id is not None:
        class_confs = jax.nn.softmax(class_confs, axis=2)
        class_confs = class_confs[:, :, config.objective_class_id]
    else:
        class_confs = jnp.max(class_confs, axis=2)
    confs_if_object = config.loss_target(objectness, class_confs)
    return jnp.max(confs_if_object, axis=1)


if __name__ == "__main__":
    key = jax.random.PRNGKey(0)
    k1, k2, k3, k4 = jax.random.split(key, 4)

    B = 2
    # n_classes=3 -> C=8 packs 16 preds per 128-lane row (packed path).
    x8 = jax.random.normal(k1, (B, 160, 8), dtype=jnp.float32)      # 160 % 16 == 0
    x8_rag = jax.random.normal(k2, (B, 150, 8), dtype=jnp.float32)  # not packable
    # n_classes=11 -> C=16 (8 preds per row); exercises deeper roll trees.
    x16 = jax.random.normal(k3, (B, 160, 16), dtype=jnp.float32)
    # realistic YOLO head: n_classes=80 -> C=85 (rows path, production-hot).
    x85 = jax.random.normal(k4, (B, 300, 85), dtype=jnp.float32)

    def check(x, cfg, tol, **kwargs):
        got = jax.block_until_ready(max_prob_extractor(x, cfg, **kwargs))
        want = max_prob_extractor_ref(x.astype(jnp.float32), cfg)
        assert got.shape == want.shape, (got.shape, want.shape)
        assert jnp.allclose(got, want, atol=tol, rtol=tol), (kwargs, got, want)

    for cid in (1, None):
        tol = 1e-2 if cid is not None else 1e-5     # approx reciprocal in softmax
        cfg = Config(n_classes=3, objective_class_id=cid)
        check(x8, cfg, tol)                                        # packed, auto block
        check(x8, cfg, tol, max_block_rows=8, num_splits=2)        # packed, multi-tile + split
        check(x8_rag, cfg, tol, max_block_rows=64)                 # rows path (ragged N)
        check(x8.astype(jnp.bfloat16), cfg, tol)                   # bf16 streaming

    for cid in (10, None):
        tol = 1e-2 if cid is not None else 1e-5
        cfg = Config(n_classes=11, objective_class_id=cid)
        check(x16, cfg, tol, max_block_rows=8)                     # packed, deeper trees

    for cid in (42, None):
        tol = 1e-2 if cid is not None else 1e-5
        cfg = Config(n_classes=80, objective_class_id=cid)
        check(x85, cfg, tol, max_block_rows=128)                   # production rows path

    print("KERNEL_OK")
</pallas_src>

<mosaic_0001>
module attributes {stable_mosaic.version = 11 : i64} {
  func.func @_kernel_packed(%arg0: i32, %arg1: i32, %arg2: i32, %arg3: memref<1x8x128xf32, #tpu.memory_space<vmem>>, %arg4: memref<1x1x8x128xf32, #tpu.memory_space<vmem>>, %arg5: memref<8x128xf32, #tpu.memory_space<vmem>>) attributes {dimension_semantics = [#tpu.dimension_semantics<parallel>, #tpu.dimension_semantics<parallel>, #tpu.dimension_semantics<arbitrary>], iteration_bounds = array<i64: 2, 1, 2>, scalar_prefetch = 0 : i64, scratch_operands = 1 : i64, tpu.core_type = #tpu.core_type<tc>, window_params = [{transform_indices = @transform_0, window_bounds = array<i64: 1, 8, 128>}, {transform_indices = @transform_1, window_bounds = array<i64: 1, 1, 8, 128>}]} {
    %c0_i32 = arith.constant 0 : i32
    %0 = arith.cmpi eq, %arg2, %c0_i32 : i32
    %1 = arith.extui %0 : i1 to i32
    %c0_i32_0 = arith.constant 0 : i32
    %2 = arith.cmpi ne, %1, %c0_i32_0 : i32
    scf.if %2 {
      %cst_23 = arith.constant 0xFF800000 : f32
      %69 = vector.broadcast %cst_23 : f32 to vector<8x128xf32>
      %c0_24 = arith.constant 0 : index
      %c0_25 = arith.constant 0 : index
      %70 = vector.load %arg5[%c0_24, %c0_25] : memref<8x128xf32, #tpu.memory_space<vmem>>, vector<8x128xf32>
      tpu.vector_store %arg5[%c0_24, %c0_25], %69 {strides = array<i32>} : memref<8x128xf32, #tpu.memory_space<vmem>>, vector<8x128xf32>,
    } else {
    }
    %c0 = arith.constant 0 : index
    %c0_1 = arith.constant 0 : index
    %c0_2 = arith.constant 0 : index
    %3 = vector.load %arg3[%c0, %c0_1, %c0_2] : memref<1x8x128xf32, #tpu.memory_space<vmem>>, vector<1x8x128xf32>
    %4 = vector.shape_cast %3 : vector<1x8x128xf32> to vector<8x128xf32>
    %5 = tpu.iota {dimensions = array<i32: 1>} : vector<8x128xi32>
    %c8_i32 = arith.constant 8 : i32
    %c0_i32_3 = arith.constant 0 : i32
    %6 = arith.cmpi eq, %c8_i32, %c0_i32_3 : i32
    %c1_i32 = arith.constant 1 : i32
    %7 = arith.select %6, %c1_i32, %c8_i32 : i32
    %8 = vector.broadcast %7 : i32 to vector<8x128xi32>
    %9 = arith.remsi %5, %8 : vector<8x128xi32>
    %c0_i32_4 = arith.constant 0 : i32
    %10 = vector.broadcast %c0_i32_4 : i32 to vector<8x128xi32>
    %11 = arith.cmpi ne, %9, %10 : vector<8x128xi32>
    %c0_i32_5 = arith.constant 0 : i32
    %12 = vector.broadcast %c0_i32_5 : i32 to vector<8x128xi32>
    %13 = arith.cmpi slt, %9, %12 : vector<8x128xi32>
    %c0_i32_6 = arith.constant 0 : i32
    %14 = arith.cmpi slt, %7, %c0_i32_6 : i32
    %15 = vector.broadcast %14 : i1 to vector<8x128xi1>
    %16 = vector.broadcast %15 : vector<8x128xi1> to vector<8x128xi1>
    %17 = arith.xori %13, %16 : vector<8x128xi1>
    %18 = arith.andi %17, %11 : vector<8x128xi1>
    %19 = vector.broadcast %7 : i32 to vector<8x128xi32>
    %20 = arith.addi %9, %19 : vector<8x128xi32>
    %21 = arith.select %18, %20, %9 : vector<8x128xi1>, vector<8x128xi32>
    %c4_i32 = arith.constant 4 : i32
    %22 = vector.broadcast %c4_i32 : i32 to vector<8x128xi32>
    %23 = arith.cmpi eq, %21, %22 : vector<8x128xi32>
    %c5_i32 = arith.constant 5 : i32
    %24 = vector.broadcast %c5_i32 : i32 to vector<8x128xi32>
    %25 = arith.cmpi sge, %21, %24 : vector<8x128xi32>
    %cst = arith.constant 0xFF800000 : f32
    %26 = vector.broadcast %cst : f32 to vector<8x128xf32>
    %27 = arith.select %25, %4, %26 : vector<8x128xi1>, vector<8x128xf32>
    %c127_i32 = arith.constant 127 : i32
    %28 = tpu.dynamic_rotate %27 by %c127_i32 dim 1 : vector<8x128xf32>, i32 -> vector<8x128xf32>
    %29 = arith.maximumf %27, %28 : vector<8x128xf32>
    %c126_i32 = arith.constant 126 : i32
    %30 = tpu.dynamic_rotate %29 by %c126_i32 dim 1 : vector<8x128xf32>, i32 -> vector<8x128xf32>
    %31 = arith.maximumf %29, %30 : vector<8x128xf32>
    %cst_7 = arith.constant 0xFF800000 : f32
    %32 = vector.broadcast %cst_7 : f32 to vector<8x128xf32>
    %33 = arith.select %23, %31, %32 : vector<8x128xi1>, vector<8x128xf32>
    %c1_i32_8 = arith.constant 1 : i32
    %34 = tpu.dynamic_rotate %33 by %c1_i32_8 dim 1 : vector<8x128xf32>, i32 -> vector<8x128xf32>
    %35 = arith.maximumf %33, %34 : vector<8x128xf32>
    %c2_i32 = arith.constant 2 : i32
    %36 = tpu.dynamic_rotate %35 by %c2_i32 dim 1 : vector<8x128xf32>, i32 -> vector<8x128xf32>
    %37 = arith.maximumf %35, %36 : vector<8x128xf32>
    %38 = arith.subf %4, %37 : vector<8x128xf32>
    %39 = math.exp %38 : vector<8x128xf32>
    %cst_9 = arith.constant 0.000000e+00 : f32
    %40 = vector.broadcast %cst_9 : f32 to vector<8x128xf32>
    %41 = arith.select %25, %39, %40 : vector<8x128xi1>, vector<8x128xf32>
    %c127_i32_10 = arith.constant 127 : i32
    %42 = tpu.dynamic_rotate %41 by %c127_i32_10 dim 1 : vector<8x128xf32>, i32 -> vector<8x128xf32>
    %43 = arith.addf %41, %42 : vector<8x128xf32>
    %c126_i32_11 = arith.constant 126 : i32
    %44 = tpu.dynamic_rotate %43 by %c126_i32_11 dim 1 : vector<8x128xf32>, i32 -> vector<8x128xf32>
    %45 = arith.addf %43, %44 : vector<8x128xf32>
    %c126_i32_12 = arith.constant 126 : i32
    %46 = tpu.dynamic_rotate %41 by %c126_i32_12 dim 1 : vector<8x128xf32>, i32 -> vector<8x128xf32>
    %47 = tpu.reciprocal %45 {approx = true} : vector<8x128xf32> -> vector<8x128xf32>
    %48 = arith.mulf %46, %47 : vector<8x128xf32>
    %49 = arith.mulf %4, %48 : vector<8x128xf32>
    %50 = tpu.iota {dimensions = array<i32: 0>} : vector<8x128xi32>
    %c2_i32_13 = arith.constant 2 : i32
    %51 = arith.muli %arg1, %c2_i32_13 : i32
    %52 = arith.addi %51, %arg2 : i32
    %c8_i32_14 = arith.constant 8 : i32
    %53 = arith.muli %52, %c8_i32_14 : i32
    %54 = vector.broadcast %53 : i32 to vector<8x128xi32>
    %55 = arith.addi %54, %50 : vector<8x128xi32>
    %c10_i32 = arith.constant 10 : i32
    %56 = vector.broadcast %c10_i32 : i32 to vector<8x128xi32>
    %57 = arith.cmpi slt, %55, %56 : vector<8x128xi32>
    %58 = arith.andi %23, %57 : vector<8x128xi1>
    %cst_15 = arith.constant 0xFF800000 : f32
    %59 = vector.broadcast %cst_15 : f32 to vector<8x128xf32>
    %60 = arith.select %58, %49, %59 : vector<8x128xi1>, vector<8x128xf32>
    %61 = vector.shape_cast %60 : vector<8x128xf32> to vector<1x8x128xf32>
    %cst_16 = arith.constant dense<0xFF800000> : vector<8x128xf32>
    %62 = vector.multi_reduction <maximumf>, %61, %cst_16 [0] : vector<1x8x128xf32> to vector<8x128xf32>
    %c0_17 = arith.constant 0 : index
    %c0_18 = arith.constant 0 : index
    %63 = vector.load %arg5[%c0_17, %c0_18] : memref<8x128xf32, #tpu.memory_space<vmem>>, vector<8x128xf32>
    %64 = arith.maximumf %63, %62 : vector<8x128xf32>
    %c0_19 = arith.constant 0 : index
    %c0_20 = arith.constant 0 : index
    %65 = vector.load %arg5[%c0_19, %c0_20] : memref<8x128xf32, #tpu.memory_space<vmem>>, vector<8x128xf32>
    tpu.vector_store %arg5[%c0_19, %c0_20], %64 {strides = array<i32>} : memref<8x128xf32, #tpu.memory_space<vmem>>, vector<8x128xf32>,
    %c1_i32_21 = arith.constant 1 : i32
    %66 = arith.cmpi eq, %arg2, %c1_i32_21 : i32
    %67 = arith.extui %66 : i1 to i32
    %c0_i32_22 = arith.constant 0 : i32
    %68 = arith.cmpi ne, %67, %c0_i32_22 : i32
    scf.if %68 {
      %c0_23 = arith.constant 0 : index
      %c0_24 = arith.constant 0 : index
      %69 = vector.load %arg5[%c0_23, %c0_24] : memref<8x128xf32, #tpu.memory_space<vmem>>, vector<8x128xf32>
      %70 = vector.shape_cast %69 : vector<8x128xf32> to vector<1x1x8x128xf32>
      %c0_25 = arith.constant 0 : index
      %c0_26 = arith.constant 0 : index
      %c0_27 = arith.constant 0 : index
      %c0_28 = arith.constant 0 : index
      %71 = vector.load %arg4[%c0_25, %c0_26, %c0_27, %c0_28] : memref<1x1x8x128xf32, #tpu.memory_space<vmem>>, vector<1x1x8x128xf32>
      tpu.vector_store %arg4[%c0_25, %c0_26, %c0_27, %c0_28], %70 {strides = array<i32>} : memref<1x1x8x128xf32, #tpu.memory_space<vmem>>, vector<1x1x8x128xf32>,
    } else {
    }
    return
  }
  func.func @transform_0(%arg0: i32, %arg1: i32, %arg2: i32) -> (i32, i32, i32) {
    %c2_i32 = arith.constant 2 : i32
    %0 = arith.muli %arg1, %c2_i32 : i32
    %1 = arith.addi %0, %arg2 : i32
    %c0_i32 = arith.constant 0 : i32
    %c0_i32_0 = arith.constant 0 : i32
    return %arg0, %1, %c0_i32 : i32, i32, i32
  }
  func.func @transform_1(%arg0: i32, %arg1: i32, %arg2: i32) -> (i32, i32, i32, i32) {
    %c0_i32 = arith.constant 0 : i32
    %c0_i32_0 = arith.constant 0 : i32
    %c0_i32_1 = arith.constant 0 : i32
    return %arg0, %arg1, %c0_i32, %c0_i32_0 : i32, i32, i32, i32
  }
}

</mosaic_0001>

<llo_original>
// kernel: tpu_custom_call.1
$region0: #{tpu_custom_call.1}
  #allocation0 [shape = 'u32[]', space=smem, size = 0x4, offset = 0x4, fixed_abs, tag = 'smem constant byte address 0x4 - core index']
  #allocation1 [shape = 'u32[144,128]{1,0:T(1,128)}', space=vmem, size = 0x12000, scoped, tag = 'internal scratch']
  #allocation2 [shape = 'f32[8,128]{1,0:T(8,128)}', space=vmem, size = 0x1000, scoped, tag = 'scratch operand']
  %s0 = inlined_call_operand.vmem [shape: f32[2,10,128], index: 0, kind: input, shape index: {}]
  %s1 = inlined_call_operand.hbm [shape: f32[2,1,8,128], index: 1, kind: output, shape index: {}]
  %s2 = sld [smem:[#allocation0]]
  $region45: #{tpu_custom_call.1} parent=0
    _
  %s4 = ssub.s32 1, %s2
  %s5 = scalar_select 0, %s4, %s2
  $region1: #{tpu_custom_call.1} parent=0
    #allocation3 [shape = 'u8[8192]{0}', space=vmem, size = 0x2000, scoped, tag = 'output window, operand 0']
    #allocation4 [shape = 's32[2]{0}', space=sflag, size = 0x8, scoped, tag = 'scoped memory for tpu_custom_call.1']
    %6 = vsyncpa [#allocation4], 0
    %s7 = scalar_lea.sflag [#allocation4], 1
    %8 = vsyncpa %s7, 0
    loop: start=0, step=1, limit=6
    $region2: #{tpu_custom_call.1} parent=1 // loop_pre_header
      _
    $region3: #{tpu_custom_call.1} parent=1 // loop_header
      %s10 = sphi 0, %s14
      %p11 = scmp.ge.s32.totalorder %s10, 6
      %s17 = sphi 0, %s36
      %s18 = sphi 0, %s32
      %s19 = sphi 0, %s28
      %s20 = sphi 0, %s17
      %s21 = sphi 0, %s18
      %s22 = sphi 0, %s19
      %s23 = sphi 0, %s20
      %s24 = sphi 0, %s21
      %s25 = sphi 0, %s22
      %s45 = sphi 0, %s47
      %s48 = sphi 0, %s45
      %s49 = sphi 0, %s48
      %s65 = sphi 0, %s49
      %s73 = sphi 0, %s75
      %s76 = sphi 0, %s73
      %s77 = sphi 0, %s76
      %s93 = sphi 0, %s77
    $region4: #{tpu_custom_call.1} parent=1 // loop_header_branch
      %13 = sbr.rel (%p11) target = $region8
    $region5: #{tpu_custom_call.1} parent=1 // loop_body
      %s15 = ssub.s32 %s10, 1
      %s16 = ssub.s32 %s10, 2
      %s26 = sadd.s32 1, %s19
      %p27 = scmp.ge.s32.totalorder %s26, 2
      %s28 = scalar_select %p27, 0, %s26
      %s29 = sadd.s32 1, %s18
      %s30 = scalar_select %p27, %s29, %s18
      %p31 = scmp.ge.s32.totalorder %s30, 1
      %s32 = scalar_select %p31, 0, %s30
      %s33 = sadd.s32 1, %s17
      %s34 = scalar_select %p31, %s33, %s17
      %p35 = scmp.ge.s32.totalorder %s34, 2
      %s36 = scalar_select %p35, 0, %s34
      %s37 = smul.u32 %s18, 2
      %s38 = sadd.s32 %s37, %s19
      %s39 = smul.u32 %s32, 2
      %s40 = sadd.s32 %s39, %s28
      %s41 = ssub.s32 %s17, %s36
      %s42 = ssub.s32 %s38, %s40
      %s43 = sor.u32 %s41, %s42
      %p44 = scmp.eq.s32.totalorder %s43, 0
      %s46 = sadd.s32 %s45, 1
      %s47 = scalar_select %p44, %s45, %s46
      %p50 = pneg %p44
      %p51 = scmp.eq.s32.totalorder %s10, 3
      %p52 = por %p50, %p51
      %p53 = scmp.ne.s32.totalorder %s45, %s48
      %p54 = scmp.eq.s32.totalorder %s10, 0
      %p55 = por %p53, %p54
      %p56 = scmp.ne.s32.totalorder %s45, %s48
      %p57 = scmp.eq.s32.totalorder %s15, 3
      %p58 = por %p56, %p57
      %p59 = scmp.ne.s32.totalorder %s48, %s49
      %p60 = scmp.eq.s32.totalorder %s15, 0
      %p61 = por %p59, %p60
      %p62 = scmp.ne.s32.totalorder %s48, %s49
      %p63 = scmp.eq.s32.totalorder %s16, 3
      %p64 = por %p62, %p63
      %p66 = scmp.ne.s32.totalorder %s49, %s65
      %p67 = scmp.eq.s32.totalorder %s16, 0
      %p68 = por %p66, %p67
      %s69 = ssub.s32 %s17, %s36
      %s70 = ssub.s32 %s18, %s32
      %s71 = sor.u32 %s69, %s70
      %p72 = scmp.eq.s32.totalorder %s71, 0
      %s74 = sadd.s32 %s73, 1
      %s75 = scalar_select %p72, %s73, %s74
      %p78 = pneg %p72
      %p79 = scmp.eq.s32.totalorder %s10, 3
      %p80 = por %p78, %p79
      %p81 = scmp.ne.s32.totalorder %s73, %s76
      %p82 = scmp.eq.s32.totalorder %s10, 0
      %p83 = por %p81, %p82
      %p84 = scmp.ne.s32.totalorder %s73, %s76
      %p85 = scmp.eq.s32.totalorder %s15, 3
      %p86 = por %p84, %p85
      %p87 = scmp.ne.s32.totalorder %s76, %s77
      %p88 = scmp.eq.s32.totalorder %s15, 0
      %p89 = por %p87, %p88
      %p90 = scmp.ne.s32.totalorder %s76, %s77
      %p91 = scmp.eq.s32.totalorder %s16, 3
      %p92 = por %p90, %p91
      %p94 = scmp.ne.s32.totalorder %s77, %s93
      %p95 = scmp.eq.s32.totalorder %s16, 0
      %p96 = por %p94, %p95
      %p97 = scmp.le.s32.totalorder 1, %s10
      %p98 = scmp.lt.s32.totalorder %s10, 5
      %p99 = pnand %p97, %p98
      %p100 = pneg %p99
      // Predicated region
      $region9: #{tpu_custom_call.1} parent=5 // pred_check
        _
      $region10: #{tpu_custom_call.1} parent=5 // pred_check_branch
        %102 = sbr.rel (%p99) target = $region12
      $region11: #{tpu_custom_call.1} parent=5 // pred_region
        %s103 = ssub.s32 %s10, 1
      $region12: #{tpu_custom_call.1} parent=5 // pred_fallthru
        _
      %p104 = scmp.lt.s32.totalorder %s10, 4
      // Predicated region
      $region13: #{tpu_custom_call.1} parent=5 // pred_check
        %p105 = pneg %p104
      $region14: #{tpu_custom_call.1} parent=5 // pred_check_branch
        %107 = sbr.rel (%p105) target = $region16
      $region15: #{tpu_custom_call.1} parent=5 // pred_region
        // Predicated region
        $region17: #{tpu_custom_call.1} parent=15 // pred_check
          %p108 = pneg %p55
        $region18: #{tpu_custom_call.1} parent=15 // pred_check_branch
          %110 = sbr.rel (%p108) target = $region20
        $region19: #{tpu_custom_call.1} parent=15 // pred_region
          %s111 = smul.u32 %s18, 2
          %s112 = sadd.s32 %s111, %s19
          %p113 = scmp.lt.s32.totalorder %s17, 1
          %s114 = scalar_select %p113, %s17, 1
          %p115 = scmp.lt.s32.totalorder %s112, 1
          %s116 = scalar_select %p115, %s112, 1
          %s117 = smul.addr %s114, 2
          %s118 = sadd.s32 %s116, %s117
          %s119 = smul.addr %s118, 8
          %s120 = scalar_lea.vmem %s0, %s119
          %s121 = smul.u32 %s18, 2
          %s122 = sadd.s32 %s121, %s19
        $region20: #{tpu_custom_call.1} parent=15 // pred_fallthru
          _
      $region16: #{tpu_custom_call.1} parent=5 // pred_fallthru
        _
      %p123 = scmp.le.s32.totalorder 1, %s10
      %p124 = scmp.lt.s32.totalorder %s10, 5
      %p125 = pnand %p123, %p124
      %p126 = pneg %p125
      // Predicated region
      $region21: #{tpu_custom_call.1} parent=5 // pred_check
        _
      $region22: #{tpu_custom_call.1} parent=5 // pred_check_branch
        %128 = sbr.rel (%p125) target = $region24
      $region23: #{tpu_custom_call.1} parent=5 // pred_region
        %s129 = ssub.s32 %s10, 1
        %s130 = smul.u32 %s21, 2
        %s131 = sadd.s32 %s130, %s22
        %p132 = scmp.lt.s32.totalorder %s20, 1
        %s133 = scalar_select %p132, %s20, 1
        %p134 = scmp.lt.s32.totalorder %s131, 1
        %s135 = scalar_select %p134, %s131, 1
        %s136 = smul.addr %s133, 2
        %s137 = sadd.s32 %s135, %s136
        %s138 = smul.addr %s137, 8
        %s139 = scalar_lea.vmem %s0, %s138
        %p140 = pneg %p61
        %p141 = pneg %p58
        %p142 = pneg %p89
        %p143 = pneg %p86
        %s144 = sand.u32 %s76, 1
        %s145 = scalar_lea.sflag [#allocation4], %s144
        %s146 = sand.u32 %s76, 1
        %s147 = smul.addr %s146, 8
        %s148 = scalar_lea.vmem [#allocation3], %s147
        %s149 = smul.u32 %s21, 2
        %s150 = sadd.s32 %s149, %s22
        %p151 = scmp.lt.s32.totalorder %s20, 1
        %s152 = scalar_select %p151, %s20, 1
        %p153 = scmp.lt.s32.totalorder %s150, 1
        %s154 = scalar_select %p153, %s150, 1
        %s155 = smul.addr %s152, 2
        %s156 = sadd.s32 %s154, %s155
        %s157 = smul.addr %s156, 8
        %s158 = scalar_lea.vmem %s0, %s157
        %s159 = smul.u32 %s21, 2
        %s160 = sadd.s32 %s159, %s22
        %p161 = scmp.eq.s32.totalorder %s22, 0
        // Predicated region
        $region25: #{tpu_custom_call.1} parent=23 // pred_check
          %p162 = pneg %p161
        $region26: #{tpu_custom_call.1} parent=23 // pred_check_branch
          %164 = sbr.rel (%p162) target = $region28
        $region27: #{tpu_custom_call.1} parent=23 // pred_region
          %165 = vst [vmem:[#allocation2] sm:$0xff] -inf
        $region28: #{tpu_custom_call.1} parent=23 // pred_fallthru
          _
        %v166 = vld [vmem:[%s158] sm:$0xff]
        %v167 = vlaneseq
        %v168 = vand.u32 %v167, 127
        %vm169 = vcmp.lt.s32.totalorder %v168, 0
        %v170 = vsub.s32 0, %v168
        %v171 = vsel %vm169, %v170, %v168
        %v172 = vshrl.u32 %v171, 3
        %v173 = vand.u32 %v171, 7
        %v174 = vsub.s32 0, %v173
        %v175 = vsel %vm169, %v174, %v173
        %vm176 = vcmp.ne.s32.totalorder %v175, 0
        %vm177 = vcmp.lt.s32.totalorder %v175, 0
        %vm178 = vmand %vm177, %vm176
        %v179 = vadd.s32 %v175, 8
        %v180 = vsel %vm178, %v179, %v175
        %vm181 = vcmp.eq.s32.totalorder %v180, 4
        %vm182 = vcmp.ge.s32.totalorder %v180, 5
        %v183 = vsel %vm182, %v166, -inf
        %184 = vrot.lane.b32.xlu0 %v183, 127
        %v185 = vpop.permute.xlu0 %184
        %v186 = vmax.f32 %v183, %v185
        %187 = vrot.lane.b32.xlu0 %v186, 126
        %v188 = vpop.permute.xlu0 %187
        %v189 = vmax.f32 %v186, %v188
        %v190 = vsel %vm181, %v189, -inf
        %191 = vrot.lane.b32.xlu0 %v190, 1
        %v192 = vpop.permute.xlu0 %191
        %v193 = vmax.f32 %v190, %v192
        %194 = vrot.lane.b32.xlu0 %v193, 2
        %v195 = vpop.permute.xlu0 %194
        %v196 = vmax.f32 %v193, %v195
        %v197 = vsub.f32 %v166, %v196
        %v198 = vmul.f32 %v197, 1.442695
        %v199 = vpow.pop %v198
        %v200 = vsel %vm182, %v199, 0.0
        %201 = vrot.lane.b32.xlu0 %v200, 127
        %v202 = vpop.permute.xlu0 %201
        %v203 = vadd.f32 %v200, %v202
        %204 = vrot.lane.b32.xlu0 %v203, 126
        %v205 = vpop.permute.xlu0 %204
        %v206 = vadd.f32 %v203, %v205
        %207 = vrot.lane.b32.xlu0 %v200, 126
        %v208 = vpop.permute.xlu0 %207
        %v209 = vrcp.pop %v206
        %v210 = vmul.f32 %v208, %v209
        %v211 = vmul.f32 %v166, %v210
        %v212 = vlaneseq
        %v213 = vshrl.u32 %v212, 7
        %s214 = smul.u32 %s21, 2
        %s215 = sadd.s32 %s214, %s22
        %s216 = smul.u32 %s215, 8
        %v217 = vstv %s216
        %v218 = vadd.s32 %v217, %v213
        %vm219 = vcmp.lt.s32.totalorder %v218, 10
        %vm220 = vmand %vm181, %vm219
        %v221 = vsel %vm220, %v211, -inf
        %v222 = vld [vmem:[#allocation2] sm:$0xff]
        %v223 = vmax.f32 %v222, %v221
        %224 = vst [vmem:[#allocation2] sm:$0xff] %v223
        %p225 = scmp.eq.s32.totalorder %s22, 1
        // Predicated region
        $region29: #{tpu_custom_call.1} parent=23 // pred_check
          %p226 = pneg %p225
        $region30: #{tpu_custom_call.1} parent=23 // pred_check_branch
          %228 = sbr.rel (%p226) target = $region32
        $region31: #{tpu_custom_call.1} parent=23 // pred_region
          %v229 = vld [vmem:[#allocation2] sm:$0xff]
          %230 = vst [vmem:[%s148] sm:$0xff] %v229
        $region32: #{tpu_custom_call.1} parent=23 // pred_fallthru
          _
        %s231 = sand.u32 %s76, 1
        %s232 = scalar_lea.sflag [#allocation4], %s231
        %s233 = sand.u32 %s76, 1
        %s234 = smul.addr %s233, 8
        %s235 = scalar_lea.vmem [#allocation3], %s234
        // Predicated region
        $region33: #{tpu_custom_call.1} parent=23 // pred_check
          %p236 = pneg %p86
        $region34: #{tpu_custom_call.1} parent=23 // pred_check_branch
          %238 = sbr.rel (%p236) target = $region36
        $region35: #{tpu_custom_call.1} parent=23 // pred_region
          %s240 = ssub.s32 128, 128
          %241 = vsyncadd %s232, %s240
          %s242 = sadd.s32 %s21, %s20
          %s243 = smul.addr %s242, 128
          %s244 = scalar_lea.hbm %s1, %s243
          %s246 = sshll.u32 %s235, 4
          %s247 = int_to_ptr.vmem [resolvable:$true] %s246
          %249 = dma.vmem_to_hbm [thread:$0]  %s247, 128, %s244, %s232
        $region36: #{tpu_custom_call.1} parent=23 // pred_fallthru
          _
      $region24: #{tpu_custom_call.1} parent=5 // pred_fallthru
        _
      %p250 = scmp.le.s32.totalorder 2, %s10
      // Predicated region
      $region37: #{tpu_custom_call.1} parent=5 // pred_check
        %p251 = pneg %p250
      $region38: #{tpu_custom_call.1} parent=5 // pred_check_branch
        %253 = sbr.rel (%p251) target = $region40
      $region39: #{tpu_custom_call.1} parent=5 // pred_region
        %s254 = ssub.s32 %s10, 2
        // Predicated region
        $region41: #{tpu_custom_call.1} parent=39 // pred_check
          %p255 = pneg %p92
        $region42: #{tpu_custom_call.1} parent=39 // pred_check_branch
          %257 = sbr.rel (%p255) target = $region44
        $region43: #{tpu_custom_call.1} parent=39 // pred_region
          %s258 = sand.u32 %s77, 1
          %s259 = scalar_lea.sflag [#allocation4], %s258
          %s260 = sand.u32 %s77, 1
          %s261 = smul.addr %s260, 8
          %s262 = scalar_lea.vmem [#allocation3], %s261
          %263 = dma.done %s259, 128
        $region44: #{tpu_custom_call.1} parent=39 // pred_fallthru
          _
      $region40: #{tpu_custom_call.1} parent=5 // pred_fallthru
        _
    $region6: #{tpu_custom_call.1} parent=1 // loop_footer
      %s14 = sadd.s32 1, %s10
    $region7: #{tpu_custom_call.1} parent=1 // loop_footer_branch
      %9 = sbr.rel target = $region3
    $region8: #{tpu_custom_call.1} parent=1 // loop_exit
      _
    %264 = vsyncpa [#allocation4], 1
    %s265 = scalar_lea.sflag [#allocation4], 1
    %266 = vsyncpa %s265, 1

</llo_original>
